<compile_context>
chip_gen: v7x
topology: tpu7x:2x2x1
jax: 0.10.0
libtpu: 0.0.40
codegen_flags: <defaults>
</compile_context>

<pallas_src>
import jax
import jax.numpy as jnp
from jax.experimental import pallas as pl
from jax.experimental.pallas import tpu as pltpu

EPS = 1e-5


def _cln_kernel(x_ref, es_ref, eh_ref, o_ref):
    """One grid step == one (batch, seq-tile) block.

    x_ref  : (1, TS, F)  input block
    es_ref : (1, 1, F)   per-batch effective scale  = gamma * (1 + clip(scale))
    eh_ref : (1, 1, F)   per-batch effective shift  = beta  * (1 + clip(scale)) + shift
    o_ref  : (1, TS, F)  output block
    """
    x = x_ref[0].astype(jnp.float32)                      # (TS, F)

    # LayerNorm statistics over the last dim (biased variance, like PyTorch).
    mean = jnp.mean(x, axis=-1, keepdims=True)            # (TS, 1)
    xc = x - mean
    var = jnp.mean(xc * xc, axis=-1, keepdims=True)       # (TS, 1)
    inv = jax.lax.rsqrt(var + EPS)

    # Fused affine: broadcast (1, F) over (TS, F).
    out = (xc * inv) * es_ref[0] + eh_ref[0]
    o_ref[0] = out.astype(o_ref.dtype)


def _choose_seq_tile(S, F, itemsize, target_bytes=4 << 20):
    """Pick a sequence-tile height TS:
       * TS == S when the whole sequence fits in the per-block budget, else
       * the largest multiple of 8 under the budget, preferring one that
         divides S so there is no ragged last block (ragged is still legal)."""
    max_rows = max(8, target_bytes // max(1, F * itemsize))
    if S <= max_rows:
        return S
    ts = max(8, (max_rows // 8) * 8)
    t = ts
    while t >= 8:
        if S % t == 0:
            return t
        t -= 8
    return ts  # no divisor found; ragged last block handled by cdiv grid


@jax.jit
def conditional_layer_norm(x, noise_embedding, w_t, b, gamma, beta):
    """x: (B, S, F), noise_embedding: (B, ND),
    w_t: (ND, 2F) (pre-transposed Linear weight), b: (2F,), gamma/beta: (F,)."""
    B, S, F = x.shape

    # ---- Hoisted conditioning (tiny, done once in XLA) ---------------------
    ss = (noise_embedding.astype(jnp.float32) @ w_t.astype(jnp.float32)
          + b.astype(jnp.float32))                              # (B, 2F)
    scale = jnp.clip(ss[:, :F], -0.9, 10.0)                     # (B, F)
    shift = ss[:, F:]                                           # (B, F)
    one_plus = 1.0 + scale
    eff_scale = (gamma.astype(jnp.float32)[None, :] * one_plus).reshape(B, 1, F)
    eff_shift = (beta.astype(jnp.float32)[None, :] * one_plus + shift).reshape(B, 1, F)

    # ---- Tiling ------------------------------------------------------------
    itemsize = jnp.dtype(x.dtype).itemsize
    TS = _choose_seq_tile(S, F, itemsize)
    n_s = pl.cdiv(S, TS)

    grid_spec = pltpu.PrefetchScalarGridSpec(
        num_scalar_prefetch=0,
        grid=(B, n_s),
        in_specs=[
            pl.BlockSpec((1, TS, F), lambda bi, si: (bi, si, 0)),   # x
            pl.BlockSpec((1, 1, F), lambda bi, si: (bi, 0, 0)),     # eff_scale
            pl.BlockSpec((1, 1, F), lambda bi, si: (bi, 0, 0)),     # eff_shift
        ],
        out_specs=pl.BlockSpec((1, TS, F), lambda bi, si: (bi, si, 0)),
    )

    return pl.pallas_call(
        _cln_kernel,
        out_shape=jax.ShapeDtypeStruct((B, S, F), x.dtype),
        grid_spec=grid_spec,
        compiler_params=pltpu.CompilerParams(
            dimension_semantics=("parallel", "parallel"),
            vmem_limit_bytes=48 * 1024 * 1024,
        ),
    )(x, eff_scale, eff_shift)


def _reference(x, noise_embedding, w_t, b, gamma, beta):
    mean = jnp.mean(x, axis=-1, keepdims=True)
    var = jnp.mean((x - mean) ** 2, axis=-1, keepdims=True)
    normalized = (x - mean) / jnp.sqrt(var + EPS) * gamma + beta
    ss = noise_embedding @ w_t + b
    F = gamma.shape[-1]
    scale = jnp.clip(ss[..., :F], -0.9, 10.0)[:, None, :]
    shift = ss[..., F:][:, None, :]
    return normalized * (1 + scale) + shift


if __name__ == "__main__":
    # Small shapes consistent with the module's forward.
    B, S, F, ND = 2, 8, 32, 16    # batch, seq, num_features, noise_dim

    key = jax.random.PRNGKey(0)
    kx, kn, kw = jax.random.split(key, 3)

    x = jax.random.normal(kx, (B, S, F), dtype=jnp.float32)
    noise_embedding = jax.random.normal(kn, (B, ND), dtype=jnp.float32)

    # Parameter init, matching _init_weights:
    #   Linear weight: trunc_normal(std=0.02), bias: 0
    #   LayerNorm weight: 1.0, bias: 0
    # PyTorch Linear stores weight as (2F, ND); we keep it pre-transposed
    # as (ND, 2F) so the wrapper computes noise @ W^T directly.
    w_t = (jax.random.truncated_normal(kw, -2.0, 2.0, (ND, 2 * F),
                                       dtype=jnp.float32) * 0.02)
    b = jnp.zeros((2 * F,), dtype=jnp.float32)
    gamma = jnp.ones((F,), dtype=jnp.float32)
    beta = jnp.zeros((F,), dtype=jnp.float32)

    out = conditional_layer_norm(x, noise_embedding, w_t, b, gamma, beta)
    out = jax.block_until_ready(out)

    ref = _reference(x, noise_embedding, w_t, b, gamma, beta)
    assert out.shape == (B, S, F)
    assert jnp.allclose(out, ref, atol=1e-5, rtol=1e-5), "mismatch vs reference"
    # TODO(synk): the torch.isfinite asserts are host-side validation checks
    # with no in-kernel equivalent; they are omitted.

    print("KERNEL_OK")
</pallas_src>

<mosaic_0001>
module attributes {stable_mosaic.version = 11 : i64} {
  func.func @_cln_kernel(%arg0: i32, %arg1: i32, %arg2: memref<1x8x32xf32, #tpu.memory_space<vmem>>, %arg3: memref<1x1x32xf32, #tpu.memory_space<vmem>>, %arg4: memref<1x1x32xf32, #tpu.memory_space<vmem>>, %arg5: memref<1x8x32xf32, #tpu.memory_space<vmem>>) attributes {dimension_semantics = [#tpu.dimension_semantics<parallel>, #tpu.dimension_semantics<parallel>], iteration_bounds = array<i64: 2, 1>, scalar_prefetch = 0 : i64, scratch_operands = 0 : i64, tpu.core_type = #tpu.core_type<tc>, window_params = [{transform_indices = @transform_0, window_bounds = array<i64: 1, 8, 32>}, {transform_indices = @transform_1, window_bounds = array<i64: 1, 1, 32>}, {transform_indices = @transform_2, window_bounds = array<i64: 1, 1, 32>}, {transform_indices = @transform_3, window_bounds = array<i64: 1, 8, 32>}]} {
    %c0 = arith.constant 0 : index
    %c0_0 = arith.constant 0 : index
    %c0_1 = arith.constant 0 : index
    %0 = vector.load %arg2[%c0, %c0_0, %c0_1] : memref<1x8x32xf32, #tpu.memory_space<vmem>>, vector<1x8x32xf32>
    %1 = vector.shape_cast %0 : vector<1x8x32xf32> to vector<8x32xf32>
    %cst = arith.constant dense<0.000000e+00> : vector<8xf32>
    %2 = vector.multi_reduction <add>, %1, %cst [1] : vector<8x32xf32> to vector<8xf32>
    %3 = vector.shape_cast %2 : vector<8xf32> to vector<8x1xf32>
    %cst_2 = arith.constant 3.200000e+01 : f32
    %4 = vector.broadcast %cst_2 : f32 to vector<8x1xf32>
    %5 = arith.divf %3, %4 : vector<8x1xf32>
    %6 = vector.broadcast %5 : vector<8x1xf32> to vector<8x32xf32>
    %7 = arith.subf %1, %6 : vector<8x32xf32>
    %8 = arith.mulf %7, %7 : vector<8x32xf32>
    %cst_3 = arith.constant dense<0.000000e+00> : vector<8xf32>
    %9 = vector.multi_reduction <add>, %8, %cst_3 [1] : vector<8x32xf32> to vector<8xf32>
    %10 = vector.shape_cast %9 : vector<8xf32> to vector<8x1xf32>
    %cst_4 = arith.constant 3.200000e+01 : f32
    %11 = vector.broadcast %cst_4 : f32 to vector<8x1xf32>
    %12 = arith.divf %10, %11 : vector<8x1xf32>
    %cst_5 = arith.constant 9.99999974E-6 : f32
    %13 = vector.broadcast %cst_5 : f32 to vector<8x1xf32>
    %14 = arith.addf %12, %13 : vector<8x1xf32>
    %15 = math.rsqrt %14 : vector<8x1xf32>
    %16 = vector.broadcast %15 : vector<8x1xf32> to vector<8x32xf32>
    %17 = arith.mulf %7, %16 : vector<8x32xf32>
    %c0_6 = arith.constant 0 : index
    %c0_7 = arith.constant 0 : index
    %c0_8 = arith.constant 0 : index
    %18 = vector.load %arg3[%c0_6, %c0_7, %c0_8] : memref<1x1x32xf32, #tpu.memory_space<vmem>>, vector<1x1x32xf32>
    %19 = vector.shape_cast %18 : vector<1x1x32xf32> to vector<1x32xf32>
    %20 = vector.broadcast %19 : vector<1x32xf32> to vector<8x32xf32>
    %21 = arith.mulf %17, %20 : vector<8x32xf32>
    %c0_9 = arith.constant 0 : index
    %c0_10 = arith.constant 0 : index
    %c0_11 = arith.constant 0 : index
    %22 = vector.load %arg4[%c0_9, %c0_10, %c0_11] : memref<1x1x32xf32, #tpu.memory_space<vmem>>, vector<1x1x32xf32>
    %23 = vector.shape_cast %22 : vector<1x1x32xf32> to vector<1x32xf32>
    %24 = vector.broadcast %23 : vector<1x32xf32> to vector<8x32xf32>
    %25 = arith.addf %21, %24 : vector<8x32xf32>
    %c0_12 = arith.constant 0 : index
    %c0_13 = arith.constant 0 : index
    %c0_14 = arith.constant 0 : index
    %26 = vector.load %arg5[%c0_12, %c0_13, %c0_14] : memref<1x8x32xf32, #tpu.memory_space<vmem>>, vector<1x8x32xf32>
    %27 = vector.shape_cast %26 : vector<1x8x32xf32> to vector<8x32xf32>
    %28 = vector.shape_cast %25 : vector<8x32xf32> to vector<1x8x32xf32>
    tpu.vector_store %arg5[%c0_12, %c0_13, %c0_14], %28 {strides = array<i32>} : memref<1x8x32xf32, #tpu.memory_space<vmem>>, vector<1x8x32xf32>,
    return
  }
  func.func @transform_0(%arg0: i32, %arg1: i32) -> (i32, i32, i32) {
    %c0_i32 = arith.constant 0 : i32
    %c0_i32_0 = arith.constant 0 : i32
    return %arg0, %arg1, %c0_i32 : i32, i32, i32
  }
  func.func @transform_1(%arg0: i32, %arg1: i32) -> (i32, i32, i32) {
    %c0_i32 = arith.constant 0 : i32
    %c0_i32_0 = arith.constant 0 : i32
    %c0_i32_1 = arith.constant 0 : i32
    return %arg0, %c0_i32, %c0_i32_0 : i32, i32, i32
  }
  func.func @transform_2(%arg0: i32, %arg1: i32) -> (i32, i32, i32) {
    %c0_i32 = arith.constant 0 : i32
    %c0_i32_0 = arith.constant 0 : i32
    %c0_i32_1 = arith.constant 0 : i32
    return %arg0, %c0_i32, %c0_i32_0 : i32, i32, i32
  }
  func.func @transform_3(%arg0: i32, %arg1: i32) -> (i32, i32, i32) {
    %c0_i32 = arith.constant 0 : i32
    %c0_i32_0 = arith.constant 0 : i32
    return %arg0, %arg1, %c0_i32 : i32, i32, i32
  }
}

</mosaic_0001>

<llo_original>
// kernel: conditional_layer_norm.1
$region0: #{conditional_layer_norm.1}
  #allocation0 [shape = 'u32[]', space=smem, size = 0x4, offset = 0x4, fixed_abs, tag = 'smem constant byte address 0x4 - core index']
  #allocation1 [shape = 'u32[144,128]{1,0:T(1,128)}', space=vmem, size = 0x12000, scoped, tag = 'internal scratch']
  %s0 = inlined_call_operand.vmem [shape: f32[2,8,32], index: 0, kind: input, shape index: {}]
  %s1 = inlined_call_operand.vmem [shape: f32[2,1,32], index: 1, kind: input, shape index: {}]
  %s2 = inlined_call_operand.vmem [shape: f32[2,1,32], index: 2, kind: input, shape index: {}]
  %s3 = inlined_call_operand.hbm [shape: f32[2,8,32], index: 3, kind: output, shape index: {}]
  %s4 = sld [smem:[#allocation0]]
  $region45: #{conditional_layer_norm.1} parent=0
    _
  %s6 = ssub.s32 1, %s4
  %s7 = scalar_select 0, %s6, %s4
  $region1: #{conditional_layer_norm.1} parent=0
    #allocation2 [shape = 'u8[8192]{0}', space=vmem, size = 0x2000, scoped, tag = 'output window, operand 0']
    #allocation3 [shape = 's32[2]{0}', space=sflag, size = 0x8, scoped, tag = 'scoped memory for conditional_layer_norm.1']
    %8 = vsyncpa [#allocation3], 0
    %s9 = scalar_lea.sflag [#allocation3], 1
    %10 = vsyncpa %s9, 0
    loop: start=0, step=1, limit=4
    $region2: #{conditional_layer_norm.1} parent=1 // loop_pre_header
      _
    $region3: #{conditional_layer_norm.1} parent=1 // loop_header
      %s12 = sphi 0, %s16
      %p13 = scmp.ge.s32.totalorder %s12, 4
      %s19 = sphi 0, %s31
      %s20 = sphi 0, %s27
      %s21 = sphi 0, %s19
      %s22 = sphi 0, %s20
      %s23 = sphi 0, %s21
      %s24 = sphi 0, %s22
      %s36 = sphi 0, %s38
      %s39 = sphi 0, %s36
      %s40 = sphi 0, %s39
      %s56 = sphi 0, %s40
      %s62 = sphi 0, %s64
      %s65 = sphi 0, %s62
      %s66 = sphi 0, %s65
      %s82 = sphi 0, %s66
      %s88 = sphi 0, %s90
      %s91 = sphi 0, %s88
      %s92 = sphi 0, %s91
      %s108 = sphi 0, %s92
      %s116 = sphi 0, %s118
      %s119 = sphi 0, %s116
      %s120 = sphi 0, %s119
      %s136 = sphi 0, %s120
    $region4: #{conditional_layer_norm.1} parent=1 // loop_header_branch
      %15 = sbr.rel (%p13) target = $region8
    $region5: #{conditional_layer_norm.1} parent=1 // loop_body
      %s17 = ssub.s32 %s12, 1
      %s18 = ssub.s32 %s12, 2
      %s25 = sadd.s32 1, %s20
      %p26 = scmp.ge.s32.totalorder %s25, 1
      %s27 = scalar_select %p26, 0, %s25
      %s28 = sadd.s32 1, %s19
      %s29 = scalar_select %p26, %s28, %s19
      %p30 = scmp.ge.s32.totalorder %s29, 2
      %s31 = scalar_select %p30, 0, %s29
      %s32 = ssub.s32 %s19, %s31
      %s33 = ssub.s32 %s20, %s27
      %s34 = sor.u32 %s32, %s33
      %p35 = scmp.eq.s32.totalorder %s34, 0
      %s37 = sadd.s32 %s36, 1
      %s38 = scalar_select %p35, %s36, %s37
      %p41 = pneg %p35
      %p42 = scmp.eq.s32.totalorder %s12, 1
      %p43 = por %p41, %p42
      %p44 = scmp.ne.s32.totalorder %s36, %s39
      %p45 = scmp.eq.s32.totalorder %s12, 0
      %p46 = por %p44, %p45
      %p47 = scmp.ne.s32.totalorder %s36, %s39
      %p48 = scmp.eq.s32.totalorder %s17, 1
      %p49 = por %p47, %p48
      %p50 = scmp.ne.s32.totalorder %s39, %s40
      %p51 = scmp.eq.s32.totalorder %s17, 0
      %p52 = por %p50, %p51
      %p53 = scmp.ne.s32.totalorder %s39, %s40
      %p54 = scmp.eq.s32.totalorder %s18, 1
      %p55 = por %p53, %p54
      %p57 = scmp.ne.s32.totalorder %s40, %s56
      %p58 = scmp.eq.s32.totalorder %s18, 0
      %p59 = por %p57, %p58
      %s60 = ssub.s32 %s19, %s31
      %p61 = scmp.eq.s32.totalorder %s60, 0
      %s63 = sadd.s32 %s62, 1
      %s64 = scalar_select %p61, %s62, %s63
      %p67 = pneg %p61
      %p68 = scmp.eq.s32.totalorder %s12, 1
      %p69 = por %p67, %p68
      %p70 = scmp.ne.s32.totalorder %s62, %s65
      %p71 = scmp.eq.s32.totalorder %s12, 0
      %p72 = por %p70, %p71
      %p73 = scmp.ne.s32.totalorder %s62, %s65
      %p74 = scmp.eq.s32.totalorder %s17, 1
      %p75 = por %p73, %p74
      %p76 = scmp.ne.s32.totalorder %s65, %s66
      %p77 = scmp.eq.s32.totalorder %s17, 0
      %p78 = por %p76, %p77
      %p79 = scmp.ne.s32.totalorder %s65, %s66
      %p80 = scmp.eq.s32.totalorder %s18, 1
      %p81 = por %p79, %p80
      %p83 = scmp.ne.s32.totalorder %s66, %s82
      %p84 = scmp.eq.s32.totalorder %s18, 0
      %p85 = por %p83, %p84
      %s86 = ssub.s32 %s19, %s31
      %p87 = scmp.eq.s32.totalorder %s86, 0
      %s89 = sadd.s32 %s88, 1
      %s90 = scalar_select %p87, %s88, %s89
      %p93 = pneg %p87
      %p94 = scmp.eq.s32.totalorder %s12, 1
      %p95 = por %p93, %p94
      %p96 = scmp.ne.s32.totalorder %s88, %s91
      %p97 = scmp.eq.s32.totalorder %s12, 0
      %p98 = por %p96, %p97
      %p99 = scmp.ne.s32.totalorder %s88, %s91
      %p100 = scmp.eq.s32.totalorder %s17, 1
      %p101 = por %p99, %p100
      %p102 = scmp.ne.s32.totalorder %s91, %s92
      %p103 = scmp.eq.s32.totalorder %s17, 0
      %p104 = por %p102, %p103
      %p105 = scmp.ne.s32.totalorder %s91, %s92
      %p106 = scmp.eq.s32.totalorder %s18, 1
      %p107 = por %p105, %p106
      %p109 = scmp.ne.s32.totalorder %s92, %s108
      %p110 = scmp.eq.s32.totalorder %s18, 0
      %p111 = por %p109, %p110
      %s112 = ssub.s32 %s19, %s31
      %s113 = ssub.s32 %s20, %s27
      %s114 = sor.u32 %s112, %s113
      %p115 = scmp.eq.s32.totalorder %s114, 0
      %s117 = sadd.s32 %s116, 1
      %s118 = scalar_select %p115, %s116, %s117
      %p121 = pneg %p115
      %p122 = scmp.eq.s32.totalorder %s12, 1
      %p123 = por %p121, %p122
      %p124 = scmp.ne.s32.totalorder %s116, %s119
      %p125 = scmp.eq.s32.totalorder %s12, 0
      %p126 = por %p124, %p125
      %p127 = scmp.ne.s32.totalorder %s116, %s119
      %p128 = scmp.eq.s32.totalorder %s17, 1
      %p129 = por %p127, %p128
      %p130 = scmp.ne.s32.totalorder %s119, %s120
      %p131 = scmp.eq.s32.totalorder %s17, 0
      %p132 = por %p130, %p131
      %p133 = scmp.ne.s32.totalorder %s119, %s120
      %p134 = scmp.eq.s32.totalorder %s18, 1
      %p135 = por %p133, %p134
      %p137 = scmp.ne.s32.totalorder %s120, %s136
      %p138 = scmp.eq.s32.totalorder %s18, 0
      %p139 = por %p137, %p138
      %p140 = scmp.le.s32.totalorder 1, %s12
      %p141 = scmp.lt.s32.totalorder %s12, 3
      %p142 = pnand %p140, %p141
      %p143 = pneg %p142
      // Predicated region
      $region9: #{conditional_layer_norm.1} parent=5 // pred_check
        _
      $region10: #{conditional_layer_norm.1} parent=5 // pred_check_branch
        %145 = sbr.rel (%p142) target = $region12
      $region11: #{conditional_layer_norm.1} parent=5 // pred_region
        %s146 = ssub.s32 %s12, 1
      $region12: #{conditional_layer_norm.1} parent=5 // pred_fallthru
        _
      %p147 = scmp.lt.s32.totalorder %s12, 2
      // Predicated region
      $region13: #{conditional_layer_norm.1} parent=5 // pred_check
        %p148 = pneg %p147
      $region14: #{conditional_layer_norm.1} parent=5 // pred_check_branch
        %150 = sbr.rel (%p148) target = $region16
      $region15: #{conditional_layer_norm.1} parent=5 // pred_region
        // Predicated region
        $region17: #{conditional_layer_norm.1} parent=15 // pred_check
          %p151 = pneg %p46
        $region18: #{conditional_layer_norm.1} parent=15 // pred_check_branch
          %153 = sbr.rel (%p151) target = $region20
        $region19: #{conditional_layer_norm.1} parent=15 // pred_region
          %p154 = scmp.lt.s32.totalorder %s19, 1
          %s155 = scalar_select %p154, %s19, 1
          %p156 = scmp.lt.s32.totalorder %s20, 0
          %s157 = scalar_select %p156, %s20, 0
          %s158 = sadd.s32 %s157, %s155
          %s159 = smul.addr %s158, 8
          %s160 = scalar_lea.vmem %s0, %s159
        $region20: #{conditional_layer_norm.1} parent=15 // pred_fallthru
          _
        // Predicated region
        $region21: #{conditional_layer_norm.1} parent=15 // pred_check
          %p161 = pneg %p72
        $region22: #{conditional_layer_norm.1} parent=15 // pred_check_branch
          %163 = sbr.rel (%p161) target = $region24
        $region23: #{conditional_layer_norm.1} parent=15 // pred_region
          %p164 = scmp.lt.s32.totalorder %s19, 1
          %s165 = scalar_select %p164, %s19, 1
          %s166 = scalar_lea.vmem %s1, %s165
        $region24: #{conditional_layer_norm.1} parent=15 // pred_fallthru
          _
        // Predicated region
        $region25: #{conditional_layer_norm.1} parent=15 // pred_check
          %p167 = pneg %p98
        $region26: #{conditional_layer_norm.1} parent=15 // pred_check_branch
          %169 = sbr.rel (%p167) target = $region28
        $region27: #{conditional_layer_norm.1} parent=15 // pred_region
          %p170 = scmp.lt.s32.totalorder %s19, 1
          %s171 = scalar_select %p170, %s19, 1
          %s172 = scalar_lea.vmem %s2, %s171
        $region28: #{conditional_layer_norm.1} parent=15 // pred_fallthru
          _
      $region16: #{conditional_layer_norm.1} parent=5 // pred_fallthru
        _
      %p173 = scmp.le.s32.totalorder 1, %s12
      %p174 = scmp.lt.s32.totalorder %s12, 3
      %p175 = pnand %p173, %p174
      %p176 = pneg %p175
      // Predicated region
      $region29: #{conditional_layer_norm.1} parent=5 // pred_check
        _
      $region30: #{conditional_layer_norm.1} parent=5 // pred_check_branch
        %178 = sbr.rel (%p175) target = $region32
      $region31: #{conditional_layer_norm.1} parent=5 // pred_region
        %s179 = ssub.s32 %s12, 1
        %p180 = scmp.lt.s32.totalorder %s21, 1
        %s181 = scalar_select %p180, %s21, 1
        %p182 = scmp.lt.s32.totalorder %s22, 0
        %s183 = scalar_select %p182, %s22, 0
        %s184 = sadd.s32 %s183, %s181
        %s185 = smul.addr %s184, 8
        %s186 = scalar_lea.vmem %s0, %s185
        %p187 = pneg %p52
        %p188 = pneg %p49
        %p189 = scmp.lt.s32.totalorder %s21, 1
        %s190 = scalar_select %p189, %s21, 1
        %s191 = scalar_lea.vmem %s1, %s190
        %p192 = pneg %p78
        %p193 = pneg %p75
        %p194 = scmp.lt.s32.totalorder %s21, 1
        %s195 = scalar_select %p194, %s21, 1
        %s196 = scalar_lea.vmem %s2, %s195
        %p197 = pneg %p104
        %p198 = pneg %p101
        %p199 = pneg %p132
        %p200 = pneg %p129
        %s201 = sand.u32 %s119, 1
        %s202 = scalar_lea.sflag [#allocation3], %s201
        %s203 = sand.u32 %s119, 1
        %s204 = smul.addr %s203, 8
        %s205 = scalar_lea.vmem [#allocation2], %s204
        %p206 = scmp.lt.s32.totalorder %s21, 1
        %s207 = scalar_select %p206, %s21, 1
        %p208 = scmp.lt.s32.totalorder %s22, 0
        %s209 = scalar_select %p208, %s22, 0
        %s210 = sadd.s32 %s209, %s207
        %s211 = smul.addr %s210, 8
        %s212 = scalar_lea.vmem %s0, %s211
        %p213 = scmp.lt.s32.totalorder %s21, 1
        %s214 = scalar_select %p213, %s21, 1
        %s215 = scalar_lea.vmem %s1, %s214
        %p216 = scmp.lt.s32.totalorder %s21, 1
        %s217 = scalar_select %p216, %s21, 1
        %s218 = scalar_lea.vmem %s2, %s217
        %v219 = vld [vmem:[%s212] sm:$0xff]
        %vm220 = vcmask 261120
        %v221 = vsel %vm220, %v219, 0.0
        %222 = vadd.xlane.f32.xlu0 %v221
        %v223 = vpop.xlane.xlu0 %222
        %v224 = vrcp.pop 32.0
        %v225 = vmul.f32 %v223, %v224
        %v226 = vsub.f32 %v219, %v225
        %v227 = vmul.f32 %v226, %v226
        %v228 = vsel %vm220, %v227, 0.0
        %229 = vadd.xlane.f32.xlu0 %v228
        %v230 = vpop.xlane.xlu0 %229
        %v231 = vmul.f32 %v230, %v224
        %v232 = vadd.f32 %v231, 1e-05
        %v233 = vrsqrt.pop %v232
        %v234 = vmul.f32 %v226, %v233
        %v235 = vld [vmem:[%s215] sm:$0x1]
        %v237 = vlaneseq
        %v238 = vshrl.u32 %v237, 7
        %v239 = vsub.s32 0, %v238
        %v240 = vrot.slane %v235, %v239
        %v242 = vmul.f32 %v234, %v240
        %v243 = vld [vmem:[%s218] sm:$0x1]
        %v245 = vlaneseq
        %v246 = vshrl.u32 %v245, 7
        %v247 = vsub.s32 0, %v246
        %v248 = vrot.slane %v243, %v247
        %v250 = vadd.f32 %v242, %v248
        %251 = vst.msk [vmem:[%s205] sm:$0xff] %vm220, %v250
        %s252 = sand.u32 %s119, 1
        %s253 = scalar_lea.sflag [#allocation3], %s252
        %s254 = sand.u32 %s119, 1
        %s255 = smul.addr %s254, 8
        %s256 = scalar_lea.vmem [#allocation2], %s255
        // Predicated region
        $region33: #{conditional_layer_norm.1} parent=31 // pred_check
          %p257 = pneg %p129
        $region34: #{conditional_layer_norm.1} parent=31 // pred_check_branch
          %259 = sbr.rel (%p257) target = $region36
        $region35: #{conditional_layer_norm.1} parent=31 // pred_region
          %s261 = ssub.s32 128, 128
          %262 = vsyncadd %s253, %s261
          %s263 = sadd.s32 %s22, %s21
          %s264 = smul.addr %s263, 128
          %s265 = scalar_lea.hbm %s3, %s264
          %s267 = sshll.u32 %s256, 4
          %s268 = int_to_ptr.vmem [resolvable:$true] %s267
          %270 = dma.vmem_to_hbm [thread:$0]  %s268, 128, %s265, %s253
        $region36: #{conditional_layer_norm.1} parent=31 // pred_fallthru
          _
      $region32: #{conditional_layer_norm.1} parent=5 // pred_fallthru
        _
      %p271 = scmp.le.s32.totalorder 2, %s12
      // Predicated region
      $region37: #{conditional_layer_norm.1} parent=5 // pred_check
        %p272 = pneg %p271
      $region38: #{conditional_layer_norm.1} parent=5 // pred_check_branch
        %274 = sbr.rel (%p272) target = $region40
      $region39: #{conditional_layer_norm.1} parent=5 // pred_region
        %s275 = ssub.s32 %s12, 2
        // Predicated region
        $region41: #{conditional_layer_norm.1} parent=39 // pred_check
          %p276 = pneg %p135
        $region42: #{conditional_layer_norm.1} parent=39 // pred_check_branch
          %278 = sbr.rel (%p276) target = $region44
        $region43: #{conditional_layer_norm.1} parent=39 // pred_region
          %s279 = sand.u32 %s120, 1
          %s280 = scalar_lea.sflag [#allocation3], %s279
          %s281 = sand.u32 %s120, 1
          %s282 = smul.addr %s281, 8
          %s283 = scalar_lea.vmem [#allocation2], %s282
          %284 = dma.done %s280, 128
        $region44: #{conditional_layer_norm.1} parent=39 // pred_fallthru
          _
      $region40: #{conditional_layer_norm.1} parent=5 // pred_fallthru
        _
    $region6: #{conditional_layer_norm.1} parent=1 // loop_footer
      %s16 = sadd.s32 1, %s12
    $region7: #{conditional_layer_norm.1} parent=1 // loop_footer_branch
      %11 = sbr.rel target = $region3
    $region8: #{conditional_layer_norm.1} parent=1 // loop_exit
      _
    %285 = vsyncpa [#allocation3], 1
    %s286 = scalar_lea.sflag [#allocation3], 1
    %287 = vsyncpa %s286, 1

</llo_original>
